<compile_context>
chip_gen: v7x
topology: tpu7x:2x2x1
jax: 0.10.0
libtpu: 0.0.40
codegen_flags: <defaults>
</compile_context>

<pallas_src>
import functools

import jax
import jax.numpy as jnp
from jax.experimental import pallas as pl
from jax.experimental.pallas import tpu as pltpu


# ----------------------------------------------------------------------------
# Pallas kernel: four (C, tm) tiles -> one (2, tm) loss tile
# ----------------------------------------------------------------------------

def _focal_cos_kernel(p1_ref, z2_ref, p2_ref, z1_ref, o_ref, *, gamma, eps):
    eps2 = eps * eps

    def pair_loss(p_ref, z_ref):
        # Load in native dtype, upcast to f32 for VPU/EUP math (v5e has no
        # bf16 VPU, so f32 elementwise is the safe choice everywhere).
        p = p_ref[...].astype(jnp.float32)           # (C, tm)
        z = z_ref[...].astype(jnp.float32)           # (C, tm)

        # Channel reduction along sublanes -> lane-dense (1, tm) vectors.
        dot = jnp.sum(p * z, axis=0, keepdims=True)
        pn2 = jnp.sum(p * p, axis=0, keepdims=True)
        zn2 = jnp.sum(z * z, axis=0, keepdims=True)

        # torch CosineSimilarity clamps each norm at eps:
        #   1/(max(|p|,eps)*max(|z|,eps)) == rsqrt(max(pn2,eps^2)*max(zn2,eps^2))
        inv = jax.lax.rsqrt(jnp.maximum(pn2, eps2) * jnp.maximum(zn2, eps2))
        cos = dot * inv

        base = 2.0 - cos
        g = float(gamma)
        if g == 1.0:                                  # default HyperNet config
            w = base
        elif g.is_integer() and 1.0 < g <= 8.0:
            w = base
            for _ in range(int(g) - 1):               # small static unroll
                w = w * base
        else:
            w = jnp.power(base, gamma)                # general (EUP exp/log)
        return w * cos

    o_ref[0:1, :] = pair_loss(p1_ref, z2_ref)         # loss1 = f(p1, z2)
    o_ref[1:2, :] = pair_loss(p2_ref, z1_ref)         # loss2 = f(p2, z1)


# ----------------------------------------------------------------------------
# Tiling heuristic + pallas_call wrapper
# ----------------------------------------------------------------------------

def _pick_row_tile(n_rows, n_ch, itemsize):
    """Row-tile (lane) width and grid size.

    - vreg pressure: keep the live pair of f32 tiles (2*C*tm*4 B) <= ~128 KiB
      (half the 64 x 4 KiB vreg file, identical on v5e/v6e/v7x).
    - VMEM: 4 inputs x 2 pipeline buffers in native dtype <= ~8 MiB, safe
      under v5e's 16 MiB / v7x's 32 MiB scoped defaults.
    - Tiny problems run as a single grid step (per-step overhead dominates);
      large N keeps >= 2 "parallel" row tiles so v7x's 2 TCs can split them.
    """
    vreg_cap = 16384 // max(n_ch, 1)
    vmem_cap = (8 * 1024 * 1024) // (8 * max(n_ch, 1) * itemsize)
    cap = max(128, (min(vreg_cap, vmem_cap) // 128) * 128)
    if n_rows <= cap:
        return n_rows, 1            # block == full extent (legal, single step)
    return cap, pl.cdiv(n_rows, cap)


def _focal_cos_rows(p1_t, z2_t, p2_t, z1_t, *, gamma, eps):
    """Inputs: (C, N) views (channels-major). Returns (2, N) f32 losses."""
    C, N = p1_t.shape
    itemsize = jnp.dtype(p1_t.dtype).itemsize
    tm, steps = _pick_row_tile(N, C, itemsize)

    cost = pl.CostEstimate(
        flops=int(16 * N * C),                     # 2 pairs x ~8 flops/elem
        transcendentals=int(2 * N),                # one fused rsqrt per pair/row
        bytes_accessed=int(4 * N * C * itemsize + 2 * N * 4),
    )

    out = pl.pallas_call(
        functools.partial(_focal_cos_kernel, gamma=gamma, eps=eps),
        out_shape=jax.ShapeDtypeStruct((2, N), jnp.float32),
        grid_spec=pltpu.PrefetchScalarGridSpec(
            num_scalar_prefetch=0,
            grid=(steps,),
            in_specs=[pl.BlockSpec((C, tm), lambda i: (0, i))] * 4,
            out_specs=pl.BlockSpec((2, tm), lambda i: (0, i)),
        ),
        compiler_params=pltpu.CompilerParams(
            dimension_semantics=("parallel",),      # independent row tiles
            allow_input_fusion=[True, True, True, True],  # fuse T/cast producers
        ),
        cost_estimate=cost,
    )(p1_t, z2_t, p2_t, z1_t)
    return out


# ----------------------------------------------------------------------------
# Focal_cos.forward
# ----------------------------------------------------------------------------

def focal_cos_loss(p1, p2, z1, z2, idx, gamma=1.0, eps=1e-6):
    assert p1.ndim == 2 and p1.shape == p2.shape == z1.shape == z2.shape
    N, C = p1.shape

    # z.detach() -> stop_gradient (forward-identical).
    z1 = jax.lax.stop_gradient(z1)
    z2 = jax.lax.stop_gradient(z2)

    # (N, C) -> (C, N) views so the C-reduction sits on sublanes and rows on
    # lanes; with allow_input_fusion these fold into the kernel operand reads.
    losses = _focal_cos_rows(p1.T, z2.T, p2.T, z1.T, gamma=gamma, eps=eps)
    loss1 = losses[0]
    loss2 = losses[1]

    # Tiny data-dependent gather + mean stays in XLA.
    L = -(jnp.take(loss1, idx, axis=0).mean() +
          jnp.take(loss2, idx, axis=0).mean()) * 0.5
    return L


# ----------------------------------------------------------------------------

def _ref_focal_cos(p1, p2, z1, z2, idx, gamma=1.0, eps=1e-6):
    """Pure-JAX reference mirroring torch.nn.CosineSimilarity(dim=1, eps=1e-6)."""
    def cos(a, b):
        an = jnp.maximum(jnp.sqrt(jnp.sum(a * a, axis=1)), eps)
        bn = jnp.maximum(jnp.sqrt(jnp.sum(b * b, axis=1)), eps)
        return jnp.sum(a * b, axis=1) / (an * bn)
    c1 = cos(p1, z2)
    c2 = cos(p2, z1)
    l1 = jnp.power(2.0 - c1, gamma) * c1
    l2 = jnp.power(2.0 - c2, gamma) * c2
    return -(l1[idx].mean() + l2[idx].mean()) * 0.5


if __name__ == "__main__":
    key = jax.random.PRNGKey(0)

    # Case 1: shapes as used in HyperNet (rows = B*H*W = 2*16*16 = 512, C = 32).
    N, C, gamma = 512, 32, 1.0
    k1, k2, k3, k4, k5, key = jax.random.split(key, 6)
    p1 = jax.random.normal(k1, (N, C), jnp.float32)
    p2 = jax.random.normal(k2, (N, C), jnp.float32)
    z1 = jax.random.normal(k3, (N, C), jnp.float32)
    z2 = jax.random.normal(k4, (N, C), jnp.float32)
    idx = jax.random.randint(k5, (N // 2,), 0, N, dtype=jnp.int32)

    fwd = jax.jit(functools.partial(focal_cos_loss, gamma=gamma))
    L = fwd(p1, p2, z1, z2, idx)
    jax.block_until_ready(L)
    L_ref = _ref_focal_cos(p1, p2, z1, z2, idx, gamma=gamma)
    assert L.shape == () and bool(jnp.isfinite(L))
    assert bool(jnp.allclose(L, L_ref, atol=1e-5, rtol=1e-5)), (L, L_ref)

    # Case 2: non-128-multiple row count + integer gamma > 1 path.
    N2, C2, gamma2 = 200, 16, 2.0
    k1, k2, k3, k4, k5, key = jax.random.split(key, 6)
    q1 = jax.random.normal(k1, (N2, C2), jnp.float32)
    q2 = jax.random.normal(k2, (N2, C2), jnp.float32)
    y1 = jax.random.normal(k3, (N2, C2), jnp.float32)
    y2 = jax.random.normal(k4, (N2, C2), jnp.float32)
    idx2 = jax.random.randint(k5, (N2 // 2,), 0, N2, dtype=jnp.int32)

    fwd2 = jax.jit(functools.partial(focal_cos_loss, gamma=gamma2))
    L2 = fwd2(q1, q2, y1, y2, idx2)
    jax.block_until_ready(L2)
    L2_ref = _ref_focal_cos(q1, q2, y1, y2, idx2, gamma=gamma2)
    assert L2.shape == () and bool(jnp.isfinite(L2))
    assert bool(jnp.allclose(L2, L2_ref, atol=1e-5, rtol=1e-5)), (L2, L2_ref)

    print("KERNEL_OK")
</pallas_src>

<mosaic_0001>
module attributes {stable_mosaic.version = 11 : i64} {
  func.func @_focal_cos_kernel(%arg0: i32, %arg1: memref<32x512xf32, #tpu.memory_space<vmem>>, %arg2: memref<32x512xf32, #tpu.memory_space<vmem>>, %arg3: memref<32x512xf32, #tpu.memory_space<vmem>>, %arg4: memref<32x512xf32, #tpu.memory_space<vmem>>, %arg5: memref<2x512xf32, #tpu.memory_space<vmem>>) attributes {dimension_semantics = [#tpu.dimension_semantics<parallel>], iteration_bounds = array<i64: 1>, scalar_prefetch = 0 : i64, scratch_operands = 0 : i64, tpu.core_type = #tpu.core_type<tc>, window_params = [{transform_indices = @transform_0, window_bounds = array<i64: 32, 512>}, {transform_indices = @transform_1, window_bounds = array<i64: 32, 512>}, {transform_indices = @transform_2, window_bounds = array<i64: 32, 512>}, {transform_indices = @transform_3, window_bounds = array<i64: 32, 512>}, {transform_indices = @transform_4, window_bounds = array<i64: 2, 512>}]} {
    %c0 = arith.constant 0 : index
    %c0_0 = arith.constant 0 : index
    %0 = vector.load %arg1[%c0, %c0_0] : memref<32x512xf32, #tpu.memory_space<vmem>>, vector<32x512xf32>
    %c0_1 = arith.constant 0 : index
    %c0_2 = arith.constant 0 : index
    %1 = vector.load %arg2[%c0_1, %c0_2] : memref<32x512xf32, #tpu.memory_space<vmem>>, vector<32x512xf32>
    %2 = arith.mulf %0, %1 : vector<32x512xf32>
    %cst = arith.constant dense<0.000000e+00> : vector<512xf32>
    %3 = vector.multi_reduction <add>, %2, %cst [0] : vector<32x512xf32> to vector<512xf32>
    %4 = vector.shape_cast %3 : vector<512xf32> to vector<1x512xf32>
    %5 = arith.mulf %0, %0 : vector<32x512xf32>
    %cst_3 = arith.constant dense<0.000000e+00> : vector<512xf32>
    %6 = vector.multi_reduction <add>, %5, %cst_3 [0] : vector<32x512xf32> to vector<512xf32>
    %7 = vector.shape_cast %6 : vector<512xf32> to vector<1x512xf32>
    %8 = arith.mulf %1, %1 : vector<32x512xf32>
    %cst_4 = arith.constant dense<0.000000e+00> : vector<512xf32>
    %9 = vector.multi_reduction <add>, %8, %cst_4 [0] : vector<32x512xf32> to vector<512xf32>
    %10 = vector.shape_cast %9 : vector<512xf32> to vector<1x512xf32>
    %cst_5 = arith.constant 9.99999996E-13 : f32
    %11 = vector.broadcast %cst_5 : f32 to vector<1x512xf32>
    %12 = arith.maximumf %7, %11 : vector<1x512xf32>
    %cst_6 = arith.constant 9.99999996E-13 : f32
    %13 = vector.broadcast %cst_6 : f32 to vector<1x512xf32>
    %14 = arith.maximumf %10, %13 : vector<1x512xf32>
    %15 = arith.mulf %12, %14 : vector<1x512xf32>
    %16 = math.rsqrt %15 : vector<1x512xf32>
    %17 = arith.mulf %4, %16 : vector<1x512xf32>
    %cst_7 = arith.constant 2.000000e+00 : f32
    %18 = vector.broadcast %cst_7 : f32 to vector<1x512xf32>
    %19 = arith.subf %18, %17 : vector<1x512xf32>
    %20 = arith.mulf %19, %17 : vector<1x512xf32>
    %c0_8 = arith.constant 0 : index
    %c0_9 = arith.constant 0 : index
    %21 = vector.load %arg5[%c0_8, %c0_9] : memref<2x512xf32, #tpu.memory_space<vmem>>, vector<1x512xf32>
    tpu.vector_store %arg5[%c0_8, %c0_9], %20 {strides = array<i32>} : memref<2x512xf32, #tpu.memory_space<vmem>>, vector<1x512xf32>,
    %c0_10 = arith.constant 0 : index
    %c0_11 = arith.constant 0 : index
    %22 = vector.load %arg3[%c0_10, %c0_11] : memref<32x512xf32, #tpu.memory_space<vmem>>, vector<32x512xf32>
    %c0_12 = arith.constant 0 : index
    %c0_13 = arith.constant 0 : index
    %23 = vector.load %arg4[%c0_12, %c0_13] : memref<32x512xf32, #tpu.memory_space<vmem>>, vector<32x512xf32>
    %24 = arith.mulf %22, %23 : vector<32x512xf32>
    %cst_14 = arith.constant dense<0.000000e+00> : vector<512xf32>
    %25 = vector.multi_reduction <add>, %24, %cst_14 [0] : vector<32x512xf32> to vector<512xf32>
    %26 = vector.shape_cast %25 : vector<512xf32> to vector<1x512xf32>
    %27 = arith.mulf %22, %22 : vector<32x512xf32>
    %cst_15 = arith.constant dense<0.000000e+00> : vector<512xf32>
    %28 = vector.multi_reduction <add>, %27, %cst_15 [0] : vector<32x512xf32> to vector<512xf32>
    %29 = vector.shape_cast %28 : vector<512xf32> to vector<1x512xf32>
    %30 = arith.mulf %23, %23 : vector<32x512xf32>
    %cst_16 = arith.constant dense<0.000000e+00> : vector<512xf32>
    %31 = vector.multi_reduction <add>, %30, %cst_16 [0] : vector<32x512xf32> to vector<512xf32>
    %32 = vector.shape_cast %31 : vector<512xf32> to vector<1x512xf32>
    %cst_17 = arith.constant 9.99999996E-13 : f32
    %33 = vector.broadcast %cst_17 : f32 to vector<1x512xf32>
    %34 = arith.maximumf %29, %33 : vector<1x512xf32>
    %cst_18 = arith.constant 9.99999996E-13 : f32
    %35 = vector.broadcast %cst_18 : f32 to vector<1x512xf32>
    %36 = arith.maximumf %32, %35 : vector<1x512xf32>
    %37 = arith.mulf %34, %36 : vector<1x512xf32>
    %38 = math.rsqrt %37 : vector<1x512xf32>
    %39 = arith.mulf %26, %38 : vector<1x512xf32>
    %cst_19 = arith.constant 2.000000e+00 : f32
    %40 = vector.broadcast %cst_19 : f32 to vector<1x512xf32>
    %41 = arith.subf %40, %39 : vector<1x512xf32>
    %42 = arith.mulf %41, %39 : vector<1x512xf32>
    %c1 = arith.constant 1 : index
    %c0_20 = arith.constant 0 : index
    %43 = vector.load %arg5[%c1, %c0_20] : memref<2x512xf32, #tpu.memory_space<vmem>>, vector<1x512xf32>
    tpu.vector_store %arg5[%c1, %c0_20], %42 {strides = array<i32>} : memref<2x512xf32, #tpu.memory_space<vmem>>, vector<1x512xf32>,
    return
  }
  func.func @transform_0(%arg0: i32) -> (i32, i32) {
    %c0_i32 = arith.constant 0 : i32
    %c0_i32_0 = arith.constant 0 : i32
    return %c0_i32, %arg0 : i32, i32
  }
  func.func @transform_1(%arg0: i32) -> (i32, i32) {
    %c0_i32 = arith.constant 0 : i32
    %c0_i32_0 = arith.constant 0 : i32
    return %c0_i32, %arg0 : i32, i32
  }
  func.func @transform_2(%arg0: i32) -> (i32, i32) {
    %c0_i32 = arith.constant 0 : i32
    %c0_i32_0 = arith.constant 0 : i32
    return %c0_i32, %arg0 : i32, i32
  }
  func.func @transform_3(%arg0: i32) -> (i32, i32) {
    %c0_i32 = arith.constant 0 : i32
    %c0_i32_0 = arith.constant 0 : i32
    return %c0_i32, %arg0 : i32, i32
  }
  func.func @transform_4(%arg0: i32) -> (i32, i32) {
    %c0_i32 = arith.constant 0 : i32
    %c0_i32_0 = arith.constant 0 : i32
    return %c0_i32, %arg0 : i32, i32
  }
}

</mosaic_0001>

<llo_original>
// kernel: focal_cos_loss.2
$region0: #{focal_cos_loss.2}
  #allocation0 [shape = 'u32[]', space=smem, size = 0x4, offset = 0x4, fixed_abs, tag = 'smem constant byte address 0x4 - core index']
  #allocation1 [shape = 'u32[144,128]{1,0:T(1,128)}', space=vmem, size = 0x12000, scoped, tag = 'internal scratch']
  %s0 = inlined_call_operand.vmem [shape: f32[512,32], index: 0, kind: input, shape index: {}]
  %s1 = inlined_call_operand.hbm [shape: f32[512,32], index: 1, kind: input, shape index: {}]
  %s2 = inlined_call_operand.hbm [shape: f32[512,32], index: 2, kind: input, shape index: {}]
  %s3 = inlined_call_operand.hbm [shape: f32[512,32], index: 3, kind: input, shape index: {}]
  %s4 = inlined_call_operand.vmem [shape: f32[2,512], index: 4, kind: output, shape index: {}]
  %s5 = sld [smem:[#allocation0]]
  $region38: #{focal_cos_loss.2} parent=0
    _
  %s7 = ssub.s32 1, %s5
  %s8 = scalar_select 0, %s7, %s5
  $region1: #{focal_cos_loss.2} parent=0
    #allocation2 [shape = 'u8[65536]{0}', space=vmem, size = 0x10000, scoped, tag = 'operand span for operand 3']
    #allocation3 [shape = 's32[1]{0}', space=sflag, size = 0x4, scoped, tag = 'scoped memory for focal_cos_loss.2']
    #allocation4 [shape = 'u8[65536]{0}', space=vmem, size = 0x10000, scoped, tag = 'operand span for operand 2']
    #allocation5 [shape = 's32[1]{0}', space=sflag, size = 0x4, scoped, tag = 'scoped memory for focal_cos_loss.2']
    #allocation6 [shape = 'u8[65536]{0}', space=vmem, size = 0x10000, scoped, tag = 'operand span for operand 1']
    #allocation7 [shape = 'u8[65536]{0}', space=vmem, size = 0x10000, dematerialized = true, scoped, tag = 'FusionAdapter Buffer %fusion.4 = f32[32,512]{1,0:T(8,128)} fusion(%param_3.4), kind=kLoop, calls=%fused_computation.6.clone, metadata={op_name="jit(focal_cos_loss)/transpose" stack_frame_id=9}']
    #allocation8 [shape = 'u8[65536]{0}', space=vmem, size = 0x10000, dematerialized = true, scoped, tag = 'FusionAdapter Buffer %fusion.3 = f32[32,512]{1,0:T(8,128)} fusion(%param_2.3), kind=kLoop, calls=%fused_computation.5.clone, metadata={op_name="jit(focal_cos_loss)/transpose" stack_frame_id=10}']
    #allocation9 [shape = 'u8[65536]{0}', space=vmem, size = 0x10000, dematerialized = true, scoped, tag = 'FusionAdapter Buffer %fusion.2 = f32[32,512]{1,0:T(8,128)} fusion(%param_1.14), kind=kLoop, calls=%fused_computation.4.clone, metadata={op_name="jit(focal_cos_loss)/transpose" stack_frame_id=11}']
    #allocation10 [shape = 'u8[65536]{0}', space=vmem, size = 0x10000, dematerialized = true, scoped, tag = 'FusionAdapter Buffer %fusion.1 = f32[32,512]{1,0:T(8,128)} fusion(%param_0.12), kind=kLoop, calls=%fused_computation.3.clone, metadata={op_name="jit(focal_cos_loss)/transpose" stack_frame_id=12}']
    %9 = vsyncpa [#allocation3], 0
    %10 = vsyncpa [#allocation5], 0
    // Predicated region
    $region2: #{focal_cos_loss.2} parent=1 // pred_check
      _
    $region3: #{focal_cos_loss.2} parent=1 // pred_check_branch
      %12 = sbr.rel (0) target = $region5
    $region4: #{focal_cos_loss.2} parent=1 // pred_region
      %s14 = ssub.s32 2048, 2048
      %15 = vsyncadd [#allocation3], %s14
      %s16 = sshll.u32 [#allocation2], 4
      %s17 = int_to_ptr.vmem [resolvable:$true] %s16
      %22 = dma.hbm_to_vmem [thread:$0]  %s3, 2048, %s17, [#allocation3], 512, 512, 32
    $region5: #{focal_cos_loss.2} parent=1 // pred_fallthru
      _
    // Predicated region
    $region6: #{focal_cos_loss.2} parent=1 // pred_check
      _
    $region7: #{focal_cos_loss.2} parent=1 // pred_check_branch
      %24 = sbr.rel (0) target = $region9
    $region8: #{focal_cos_loss.2} parent=1 // pred_region
      %s26 = ssub.s32 2048, 2048
      %27 = vsyncadd [#allocation5], %s26
      %s28 = sshll.u32 [#allocation4], 4
      %s29 = int_to_ptr.vmem [resolvable:$true] %s28
      %34 = dma.hbm_to_vmem [thread:$0]  %s2, 2048, %s29, [#allocation5], 512, 512, 32
    $region9: #{focal_cos_loss.2} parent=1 // pred_fallthru
      _
    // Predicated region
    $region10: #{focal_cos_loss.2} parent=1 // pred_check
      _
    $region11: #{focal_cos_loss.2} parent=1 // pred_check_branch
      %36 = sbr.rel (0) target = $region13
    $region12: #{focal_cos_loss.2} parent=1 // pred_region
      %s38 = ssub.s32 2048, 2048
      %39 = vsyncadd [#allocation5], %s38
      %s40 = sshll.u32 [#allocation6], 4
      %s41 = int_to_ptr.vmem [resolvable:$true] %s40
      %46 = dma.hbm_to_vmem [thread:$0]  %s1, 2048, %s41, [#allocation5], 512, 512, 32
    $region13: #{focal_cos_loss.2} parent=1 // pred_fallthru
      _
    // Predicated region
    $region14: #{focal_cos_loss.2} parent=1 // pred_check
      _
    $region15: #{focal_cos_loss.2} parent=1 // pred_check_branch
      %48 = sbr.rel (0) target = $region17
    $region16: #{focal_cos_loss.2} parent=1 // pred_region
      _
    $region17: #{focal_cos_loss.2} parent=1 // pred_fallthru
      _
    // Predicated region
    $region18: #{focal_cos_loss.2} parent=1 // pred_check
      _
    $region19: #{focal_cos_loss.2} parent=1 // pred_check_branch
      %50 = sbr.rel (0) target = $region21
    $region20: #{focal_cos_loss.2} parent=1 // pred_region
      %51 = dma.done [#allocation3], 2048
    $region21: #{focal_cos_loss.2} parent=1 // pred_fallthru
      _
    // Predicated region
    $region22: #{focal_cos_loss.2} parent=1 // pred_check
      _
    $region23: #{focal_cos_loss.2} parent=1 // pred_check_branch
      %53 = sbr.rel (0) target = $region25
    $region24: #{focal_cos_loss.2} parent=1 // pred_region
      %54 = dma.done [#allocation5], 2048
    $region25: #{focal_cos_loss.2} parent=1 // pred_fallthru
      _
    // Predicated region
    $region26: #{focal_cos_loss.2} parent=1 // pred_check
      _
    $region27: #{focal_cos_loss.2} parent=1 // pred_check_branch
      %56 = sbr.rel (0) target = $region29
    $region28: #{focal_cos_loss.2} parent=1 // pred_region
      %57 = dma.done [#allocation5], 2048
    $region29: #{focal_cos_loss.2} parent=1 // pred_fallthru
      _
    %v58 = vld [vmem:[#allocation2] sm:$0xff]
    %60 = vst [vmem:[#allocation7] sm:$0xff] %v58
    %s61 = scalar_lea.vmem [#allocation2], 8
    %v62 = vld [vmem:[%s61] sm:$0xff]
    %s63 = scalar_lea.vmem [#allocation7], 8
    %65 = vst [vmem:[%s63] sm:$0xff] %v62
    %s66 = scalar_lea.vmem [#allocation2], 16
    %v67 = vld [vmem:[%s66] sm:$0xff]
    %s68 = scalar_lea.vmem [#allocation7], 16
    %70 = vst [vmem:[%s68] sm:$0xff] %v67
    %s71 = scalar_lea.vmem [#allocation2], 24
    %v72 = vld [vmem:[%s71] sm:$0xff]
    %s73 = scalar_lea.vmem [#allocation7], 24
    %75 = vst [vmem:[%s73] sm:$0xff] %v72
    %s76 = scalar_lea.vmem [#allocation2], 32
    %v77 = vld [vmem:[%s76] sm:$0xff]
    %s78 = scalar_lea.vmem [#allocation7], 32
    %80 = vst [vmem:[%s78] sm:$0xff] %v77
    %s81 = scalar_lea.vmem [#allocation2], 40
    %v82 = vld [vmem:[%s81] sm:$0xff]
    %s83 = scalar_lea.vmem [#allocation7], 40
    %85 = vst [vmem:[%s83] sm:$0xff] %v82
    %s86 = scalar_lea.vmem [#allocation2], 48
    %v87 = vld [vmem:[%s86] sm:$0xff]
    %s88 = scalar_lea.vmem [#allocation7], 48
    %90 = vst [vmem:[%s88] sm:$0xff] %v87
    %s91 = scalar_lea.vmem [#allocation2], 56
    %v92 = vld [vmem:[%s91] sm:$0xff]
    %s93 = scalar_lea.vmem [#allocation7], 56
    %95 = vst [vmem:[%s93] sm:$0xff] %v92
    %s96 = scalar_lea.vmem [#allocation2], 64
    %v97 = vld [vmem:[%s96] sm:$0xff]
    %s98 = scalar_lea.vmem [#allocation7], 64
    %100 = vst [vmem:[%s98] sm:$0xff] %v97
    %s101 = scalar_lea.vmem [#allocation2], 72
    %v102 = vld [vmem:[%s101] sm:$0xff]
    %s103 = scalar_lea.vmem [#allocation7], 72
    %105 = vst [vmem:[%s103] sm:$0xff] %v102
    %s106 = scalar_lea.vmem [#allocation2], 80
    %v107 = vld [vmem:[%s106] sm:$0xff]
    %s108 = scalar_lea.vmem [#allocation7], 80
    %110 = vst [vmem:[%s108] sm:$0xff] %v107
    %s111 = scalar_lea.vmem [#allocation2], 88
    %v112 = vld [vmem:[%s111] sm:$0xff]
    %s113 = scalar_lea.vmem [#allocation7], 88
    %115 = vst [vmem:[%s113] sm:$0xff] %v112
    %s116 = scalar_lea.vmem [#allocation2], 96
    %v117 = vld [vmem:[%s116] sm:$0xff]
    %s118 = scalar_lea.vmem [#allocation7], 96
    %120 = vst [vmem:[%s118] sm:$0xff] %v117
    %s121 = scalar_lea.vmem [#allocation2], 104
    %v122 = vld [vmem:[%s121] sm:$0xff]
    %s123 = scalar_lea.vmem [#allocation7], 104
    %125 = vst [vmem:[%s123] sm:$0xff] %v122
    %s126 = scalar_lea.vmem [#allocation2], 112
    %v127 = vld [vmem:[%s126] sm:$0xff]
    %s128 = scalar_lea.vmem [#allocation7], 112
    %130 = vst [vmem:[%s128] sm:$0xff] %v127
    %s131 = scalar_lea.vmem [#allocation2], 120
    %v132 = vld [vmem:[%s131] sm:$0xff]
    %s133 = scalar_lea.vmem [#allocation7], 120
    %135 = vst [vmem:[%s133] sm:$0xff] %v132
    %v136 = vld [vmem:[#allocation4] sm:$0xff]
    %138 = vst [vmem:[#allocation8] sm:$0xff] %v136
    %s139 = scalar_lea.vmem [#allocation4], 8
    %v140 = vld [vmem:[%s139] sm:$0xff]
    %s141 = scalar_lea.vmem [#allocation8], 8
    %143 = vst [vmem:[%s141] sm:$0xff] %v140
    %s144 = scalar_lea.vmem [#allocation4], 16
    %v145 = vld [vmem:[%s144] sm:$0xff]
    %s146 = scalar_lea.vmem [#allocation8], 16
    %148 = vst [vmem:[%s146] sm:$0xff] %v145
    %s149 = scalar_lea.vmem [#allocation4], 24
    %v150 = vld [vmem:[%s149] sm:$0xff]
    %s151 = scalar_lea.vmem [#allocation8], 24
    %153 = vst [vmem:[%s151] sm:$0xff] %v150
    %s154 = scalar_lea.vmem [#allocation4], 32
    %v155 = vld [vmem:[%s154] sm:$0xff]
    %s156 = scalar_lea.vmem [#allocation8], 32
    %158 = vst [vmem:[%s156] sm:$0xff] %v155
    %s159 = scalar_lea.vmem [#allocation4], 40
    %v160 = vld [vmem:[%s159] sm:$0xff]
    %s161 = scalar_lea.vmem [#allocation8], 40
    %163 = vst [vmem:[%s161] sm:$0xff] %v160
    %s164 = scalar_lea.vmem [#allocation4], 48
    %v165 = vld [vmem:[%s164] sm:$0xff]
    %s166 = scalar_lea.vmem [#allocation8], 48
    %168 = vst [vmem:[%s166] sm:$0xff] %v165
    %s169 = scalar_lea.vmem [#allocation4], 56
    %v170 = vld [vmem:[%s169] sm:$0xff]
    %s171 = scalar_lea.vmem [#allocation8], 56
    %173 = vst [vmem:[%s171] sm:$0xff] %v170
    %s174 = scalar_lea.vmem [#allocation4], 64
    %v175 = vld [vmem:[%s174] sm:$0xff]
    %s176 = scalar_lea.vmem [#allocation8], 64
    %178 = vst [vmem:[%s176] sm:$0xff] %v175
    %s179 = scalar_lea.vmem [#allocation4], 72
    %v180 = vld [vmem:[%s179] sm:$0xff]
    %s181 = scalar_lea.vmem [#allocation8], 72
    %183 = vst [vmem:[%s181] sm:$0xff] %v180
    %s184 = scalar_lea.vmem [#allocation4], 80
    %v185 = vld [vmem:[%s184] sm:$0xff]
    %s186 = scalar_lea.vmem [#allocation8], 80
    %188 = vst [vmem:[%s186] sm:$0xff] %v185
    %s189 = scalar_lea.vmem [#allocation4], 88
    %v190 = vld [vmem:[%s189] sm:$0xff]
    %s191 = scalar_lea.vmem [#allocation8], 88
    %193 = vst [vmem:[%s191] sm:$0xff] %v190
    %s194 = scalar_lea.vmem [#allocation4], 96
    %v195 = vld [vmem:[%s194] sm:$0xff]
    %s196 = scalar_lea.vmem [#allocation8], 96
    %198 = vst [vmem:[%s196] sm:$0xff] %v195
    %s199 = scalar_lea.vmem [#allocation4], 104
    %v200 = vld [vmem:[%s199] sm:$0xff]
    %s201 = scalar_lea.vmem [#allocation8], 104
    %203 = vst [vmem:[%s201] sm:$0xff] %v200
    %s204 = scalar_lea.vmem [#allocation4], 112
    %v205 = vld [vmem:[%s204] sm:$0xff]
    %s206 = scalar_lea.vmem [#allocation8], 112
    %208 = vst [vmem:[%s206] sm:$0xff] %v205
    %s209 = scalar_lea.vmem [#allocation4], 120
    %v210 = vld [vmem:[%s209] sm:$0xff]
    %s211 = scalar_lea.vmem [#allocation8], 120
    %213 = vst [vmem:[%s211] sm:$0xff] %v210
    %v214 = vld [vmem:[#allocation6] sm:$0xff]
    %216 = vst [vmem:[#allocation9] sm:$0xff] %v214
    %s217 = scalar_lea.vmem [#allocation6], 8
    %v218 = vld [vmem:[%s217] sm:$0xff]
    %s219 = scalar_lea.vmem [#allocation9], 8
    %221 = vst [vmem:[%s219] sm:$0xff] %v218
    %s222 = scalar_lea.vmem [#allocation6], 16
    %v223 = vld [vmem:[%s222] sm:$0xff]
    %s224 = scalar_lea.vmem [#allocation9], 16
    %226 = vst [vmem:[%s224] sm:$0xff] %v223
    %s227 = scalar_lea.vmem [#allocation6], 24
    %v228 = vld [vmem:[%s227] sm:$0xff]
    %s229 = scalar_lea.vmem [#allocation9], 24
    %231 = vst [vmem:[%s229] sm:$0xff] %v228
    %s232 = scalar_lea.vmem [#allocation6], 32
    %v233 = vld [vmem:[%s232] sm:$0xff]
    %s234 = scalar_lea.vmem [#allocation9], 32
    %236 = vst [vmem:[%s234] sm:$0xff] %v233
    %s237 = scalar_lea.vmem [#allocation6], 40
    %v238 = vld [vmem:[%s237] sm:$0xff]
    %s239 = scalar_lea.vmem [#allocation9], 40
    %241 = vst [vmem:[%s239] sm:$0xff] %v238
    %s242 = scalar_lea.vmem [#allocation6], 48
    %v243 = vld [vmem:[%s242] sm:$0xff]
    %s244 = scalar_lea.vmem [#allocation9], 48
    %246 = vst [vmem:[%s244] sm:$0xff] %v243
    %s247 = scalar_lea.vmem [#allocation6], 56
    %v248 = vld [vmem:[%s247] sm:$0xff]
    %s249 = scalar_lea.vmem [#allocation9], 56
    %251 = vst [vmem:[%s249] sm:$0xff] %v248
    %s252 = scalar_lea.vmem [#allocation6], 64
    %v253 = vld [vmem:[%s252] sm:$0xff]
    %s254 = scalar_lea.vmem [#allocation9], 64
    %256 = vst [vmem:[%s254] sm:$0xff] %v253
    %s257 = scalar_lea.vmem [#allocation6], 72
    %v258 = vld [vmem:[%s257] sm:$0xff]
    %s259 = scalar_lea.vmem [#allocation9], 72
    %261 = vst [vmem:[%s259] sm:$0xff] %v258
    %s262 = scalar_lea.vmem [#allocation6], 80
    %v263 = vld [vmem:[%s262] sm:$0xff]
    %s264 = scalar_lea.vmem [#allocation9], 80
    %266 = vst [vmem:[%s264] sm:$0xff] %v263
    %s267 = scalar_lea.vmem [#allocation6], 88
    %v268 = vld [vmem:[%s267] sm:$0xff]
    %s269 = scalar_lea.vmem [#allocation9], 88
    %271 = vst [vmem:[%s269] sm:$0xff] %v268
    %s272 = scalar_lea.vmem [#allocation6], 96
    %v273 = vld [vmem:[%s272] sm:$0xff]
    %s274 = scalar_lea.vmem [#allocation9], 96
    %276 = vst [vmem:[%s274] sm:$0xff] %v273
    %s277 = scalar_lea.vmem [#allocation6], 104
    %v278 = vld [vmem:[%s277] sm:$0xff]
    %s279 = scalar_lea.vmem [#allocation9], 104
    %281 = vst [vmem:[%s279] sm:$0xff] %v278
    %s282 = scalar_lea.vmem [#allocation6], 112
    %v283 = vld [vmem:[%s282] sm:$0xff]
    %s284 = scalar_lea.vmem [#allocation9], 112
    %286 = vst [vmem:[%s284] sm:$0xff] %v283
    %s287 = scalar_lea.vmem [#allocation6], 120
    %v288 = vld [vmem:[%s287] sm:$0xff]
    %s289 = scalar_lea.vmem [#allocation9], 120
    %291 = vst [vmem:[%s289] sm:$0xff] %v288
    %v292 = vld [vmem:[%s0] sm:$0xff]
    %294 = vst [vmem:[#allocation10] sm:$0xff] %v292
    %s295 = scalar_lea.vmem %s0, 8
    %v296 = vld [vmem:[%s295] sm:$0xff]
    %s297 = scalar_lea.vmem [#allocation10], 8
    %299 = vst [vmem:[%s297] sm:$0xff] %v296
    %s300 = scalar_lea.vmem %s0, 16
    %v301 = vld [vmem:[%s300] sm:$0xff]
    %s302 = scalar_lea.vmem [#allocation10], 16
    %304 = vst [vmem:[%s302] sm:$0xff] %v301
    %s305 = scalar_lea.vmem %s0, 24
    %v306 = vld [vmem:[%s305] sm:$0xff]
    %s307 = scalar_lea.vmem [#allocation10], 24
    %309 = vst [vmem:[%s307] sm:$0xff] %v306
    %s310 = scalar_lea.vmem %s0, 32
    %v311 = vld [vmem:[%s310] sm:$0xff]
    %s312 = scalar_lea.vmem [#allocation10], 32
    %314 = vst [vmem:[%s312] sm:$0xff] %v311
    %s315 = scalar_lea.vmem %s0, 40
    %v316 = vld [vmem:[%s315] sm:$0xff]
    %s317 = scalar_lea.vmem [#allocation10], 40
    %319 = vst [vmem:[%s317] sm:$0xff] %v316
    %s320 = scalar_lea.vmem %s0, 48
    %v321 = vld [vmem:[%s320] sm:$0xff]
    %s322 = scalar_lea.vmem [#allocation10], 48
    %324 = vst [vmem:[%s322] sm:$0xff] %v321
    %s325 = scalar_lea.vmem %s0, 56
    %v326 = vld [vmem:[%s325] sm:$0xff]
    %s327 = scalar_lea.vmem [#allocation10], 56
    %329 = vst [vmem:[%s327] sm:$0xff] %v326
    %s330 = scalar_lea.vmem %s0, 64
    %v331 = vld [vmem:[%s330] sm:$0xff]
    %s332 = scalar_lea.vmem [#allocation10], 64
    %334 = vst [vmem:[%s332] sm:$0xff] %v331
    %s335 = scalar_lea.vmem %s0, 72
    %v336 = vld [vmem:[%s335] sm:$0xff]
    %s337 = scalar_lea.vmem [#allocation10], 72
    %339 = vst [vmem:[%s337] sm:$0xff] %v336
    %s340 = scalar_lea.vmem %s0, 80
    %v341 = vld [vmem:[%s340] sm:$0xff]
    %s342 = scalar_lea.vmem [#allocation10], 80
    %344 = vst [vmem:[%s342] sm:$0xff] %v341
    %s345 = scalar_lea.vmem %s0, 88
    %v346 = vld [vmem:[%s345] sm:$0xff]
    %s347 = scalar_lea.vmem [#allocation10], 88
    %349 = vst [vmem:[%s347] sm:$0xff] %v346
    %s350 = scalar_lea.vmem %s0, 96
    %v351 = vld [vmem:[%s350] sm:$0xff]
    %s352 = scalar_lea.vmem [#allocation10], 96
    %354 = vst [vmem:[%s352] sm:$0xff] %v351
    %s355 = scalar_lea.vmem %s0, 104
    %v356 = vld [vmem:[%s355] sm:$0xff]
    %s357 = scalar_lea.vmem [#allocation10], 104
    %359 = vst [vmem:[%s357] sm:$0xff] %v356
    %s360 = scalar_lea.vmem %s0, 112
    %v361 = vld [vmem:[%s360] sm:$0xff]
    %s362 = scalar_lea.vmem [#allocation10], 112
    %364 = vst [vmem:[%s362] sm:$0xff] %v361
    %s365 = scalar_lea.vmem %s0, 120
    %v366 = vld [vmem:[%s365] sm:$0xff]
    %s367 = scalar_lea.vmem [#allocation10], 120
    %369 = vst [vmem:[%s367] sm:$0xff] %v366
    %v370 = vld [vmem:[#allocation7] sm:$0xff]
    %v371 = vld [vmem:[#allocation7 + $0x8] sm:$0xff]
    %v372 = vld [vmem:[#allocation7 + $0x10] sm:$0xff]
    %v373 = vld [vmem:[#allocation7 + $0x18] sm:$0xff]
    %v374 = vld [vmem:[#allocation7 + $0x20] sm:$0xff]
    %v375 = vld [vmem:[#allocation7 + $0x28] sm:$0xff]
    %v376 = vld [vmem:[#allocation7 + $0x30] sm:$0xff]
    %v377 = vld [vmem:[#allocation7 + $0x38] sm:$0xff]
    %v378 = vld [vmem:[#allocation7 + $0x40] sm:$0xff]
    %v379 = vld [vmem:[#allocation7 + $0x48] sm:$0xff]
    %v380 = vld [vmem:[#allocation7 + $0x50] sm:$0xff]
    %v381 = vld [vmem:[#allocation7 + $0x58] sm:$0xff]
    %v382 = vld [vmem:[#allocation7 + $0x60] sm:$0xff]
    %v383 = vld [vmem:[#allocation7 + $0x68] sm:$0xff]
    %v384 = vld [vmem:[#allocation7 + $0x70] sm:$0xff]
    %v385 = vld [vmem:[#allocation7 + $0x78] sm:$0xff]
    %v386 = vld [vmem:[#allocation8] sm:$0xff]
    %v387 = vld [vmem:[#allocation8 + $0x8] sm:$0xff]
    %v388 = vld [vmem:[#allocation8 + $0x10] sm:$0xff]
    %v389 = vld [vmem:[#allocation8 + $0x18] sm:$0xff]
    %v390 = vld [vmem:[#allocation8 + $0x20] sm:$0xff]
    %v391 = vld [vmem:[#allocation8 + $0x28] sm:$0xff]
    %v392 = vld [vmem:[#allocation8 + $0x30] sm:$0xff]
    %v393 = vld [vmem:[#allocation8 + $0x38] sm:$0xff]
    %v394 = vld [vmem:[#allocation8 + $0x40] sm:$0xff]
    %v395 = vld [vmem:[#allocation8 + $0x48] sm:$0xff]
    %v396 = vld [vmem:[#allocation8 + $0x50] sm:$0xff]
    %v397 = vld [vmem:[#allocation8 + $0x58] sm:$0xff]
    %v398 = vld [vmem:[#allocation8 + $0x60] sm:$0xff]
    %v399 = vld [vmem:[#allocation8 + $0x68] sm:$0xff]
    %v400 = vld [vmem:[#allocation8 + $0x70] sm:$0xff]
    %v401 = vld [vmem:[#allocation8 + $0x78] sm:$0xff]
    %v402 = vmul.f32 %v370, %v386
    %v403 = vmul.f32 %v371, %v387
    %v404 = vmul.f32 %v372, %v388
    %v405 = vmul.f32 %v373, %v389
    %v406 = vmul.f32 %v374, %v390
    %v407 = vmul.f32 %v375, %v391
    %v408 = vmul.f32 %v376, %v392
    %v409 = vmul.f32 %v377, %v393
    %v410 = vmul.f32 %v378, %v394
    %v411 = vmul.f32 %v379, %v395
    %v412 = vmul.f32 %v380, %v396
    %v413 = vmul.f32 %v381, %v397
    %v414 = vmul.f32 %v382, %v398
    %v415 = vmul.f32 %v383, %v399
    %v416 = vmul.f32 %v384, %v400
    %v417 = vmul.f32 %v385, %v401
    %v418 = vadd.f32 %v402, %v406
    %v419 = vadd.f32 %v418, %v410
    %v420 = vadd.f32 %v419, %v414
    %v421 = vrot.slane %v420, 4
    %v422 = vadd.f32 %v420, %v421
    %v423 = vrot.slane %v422, 2
    %v424 = vadd.f32 %v422, %v423
    %v425 = vrot.slane %v424, 1
    %v426 = vadd.f32 %v424, %v425
    %v427 = vadd.f32 %v403, %v407
    %v428 = vadd.f32 %v427, %v411
    %v429 = vadd.f32 %v428, %v415
    %v430 = vrot.slane %v429, 4
    %v431 = vadd.f32 %v429, %v430
    %v432 = vrot.slane %v431, 2
    %v433 = vadd.f32 %v431, %v432
    %v434 = vrot.slane %v433, 1
    %v435 = vadd.f32 %v433, %v434
    %v436 = vadd.f32 %v404, %v408
    %v437 = vadd.f32 %v436, %v412
    %v438 = vadd.f32 %v437, %v416
    %v439 = vrot.slane %v438, 4
    %v440 = vadd.f32 %v438, %v439
    %v441 = vrot.slane %v440, 2
    %v442 = vadd.f32 %v440, %v441
    %v443 = vrot.slane %v442, 1
    %v444 = vadd.f32 %v442, %v443
    %v445 = vadd.f32 %v405, %v409
    %v446 = vadd.f32 %v445, %v413
    %v447 = vadd.f32 %v446, %v417
    %v448 = vrot.slane %v447, 4
    %v449 = vadd.f32 %v447, %v448
    %v450 = vrot.slane %v449, 2
    %v451 = vadd.f32 %v449, %v450
    %v452 = vrot.slane %v451, 1
    %v453 = vadd.f32 %v451, %v452
    %v454 = vmul.f32 %v370, %v370
    %v455 = vmul.f32 %v371, %v371
    %v456 = vmul.f32 %v372, %v372
    %v457 = vmul.f32 %v373, %v373
    %v458 = vmul.f32 %v374, %v374
    %v459 = vmul.f32 %v375, %v375
    %v460 = vmul.f32 %v376, %v376
    %v461 = vmul.f32 %v377, %v377
    %v462 = vmul.f32 %v378, %v378
    %v463 = vmul.f32 %v379, %v379
    %v464 = vmul.f32 %v380, %v380
    %v465 = vmul.f32 %v381, %v381
    %v466 = vmul.f32 %v382, %v382
    %v467 = vmul.f32 %v383, %v383
    %v468 = vmul.f32 %v384, %v384
    %v469 = vmul.f32 %v385, %v385
    %v470 = vadd.f32 %v454, %v458
    %v471 = vadd.f32 %v470, %v462
    %v472 = vadd.f32 %v471, %v466
    %v473 = vrot.slane %v472, 4
    %v474 = vadd.f32 %v472, %v473
    %v475 = vrot.slane %v474, 2
    %v476 = vadd.f32 %v474, %v475
    %v477 = vrot.slane %v476, 1
    %v478 = vadd.f32 %v476, %v477
    %v479 = vadd.f32 %v455, %v459
    %v480 = vadd.f32 %v479, %v463
    %v481 = vadd.f32 %v480, %v467
    %v482 = vrot.slane %v481, 4
    %v483 = vadd.f32 %v481, %v482
    %v484 = vrot.slane %v483, 2
    %v485 = vadd.f32 %v483, %v484
    %v486 = vrot.slane %v485, 1
    %v487 = vadd.f32 %v485, %v486
    %v488 = vadd.f32 %v456, %v460
    %v489 = vadd.f32 %v488, %v464
    %v490 = vadd.f32 %v489, %v468
    %v491 = vrot.slane %v490, 4
    %v492 = vadd.f32 %v490, %v491
    %v493 = vrot.slane %v492, 2
    %v494 = vadd.f32 %v492, %v493
    %v495 = vrot.slane %v494, 1
    %v496 = vadd.f32 %v494, %v495
    %v497 = vadd.f32 %v457, %v461
    %v498 = vadd.f32 %v497, %v465
    %v499 = vadd.f32 %v498, %v469
    %v500 = vrot.slane %v499, 4
    %v501 = vadd.f32 %v499, %v500
    %v502 = vrot.slane %v501, 2
    %v503 = vadd.f32 %v501, %v502
    %v504 = vrot.slane %v503, 1
    %v505 = vadd.f32 %v503, %v504
    %v506 = vmul.f32 %v386, %v386
    %v507 = vmul.f32 %v387, %v387
    %v508 = vmul.f32 %v388, %v388
    %v509 = vmul.f32 %v389, %v389
    %v510 = vmul.f32 %v390, %v390
    %v511 = vmul.f32 %v391, %v391
    %v512 = vmul.f32 %v392, %v392
    %v513 = vmul.f32 %v393, %v393
    %v514 = vmul.f32 %v394, %v394
    %v515 = vmul.f32 %v395, %v395
    %v516 = vmul.f32 %v396, %v396
    %v517 = vmul.f32 %v397, %v397
    %v518 = vmul.f32 %v398, %v398
    %v519 = vmul.f32 %v399, %v399
    %v520 = vmul.f32 %v400, %v400
    %v521 = vmul.f32 %v401, %v401
    %v522 = vadd.f32 %v506, %v510
    %v523 = vadd.f32 %v522, %v514
    %v524 = vadd.f32 %v523, %v518
    %v525 = vrot.slane %v524, 4
    %v526 = vadd.f32 %v524, %v525
    %v527 = vrot.slane %v526, 2
    %v528 = vadd.f32 %v526, %v527
    %v529 = vrot.slane %v528, 1
    %v530 = vadd.f32 %v528, %v529
    %v531 = vadd.f32 %v507, %v511
    %v532 = vadd.f32 %v531, %v515
    %v533 = vadd.f32 %v532, %v519
    %v534 = vrot.slane %v533, 4
    %v535 = vadd.f32 %v533, %v534
    %v536 = vrot.slane %v535, 2
    %v537 = vadd.f32 %v535, %v536
    %v538 = vrot.slane %v537, 1
    %v539 = vadd.f32 %v537, %v538
    %v540 = vadd.f32 %v508, %v512
    %v541 = vadd.f32 %v540, %v516
    %v542 = vadd.f32 %v541, %v520
    %v543 = vrot.slane %v542, 4
    %v544 = vadd.f32 %v542, %v543
    %v545 = vrot.slane %v544, 2
    %v546 = vadd.f32 %v544, %v545
    %v547 = vrot.slane %v546, 1
    %v548 = vadd.f32 %v546, %v547
    %v549 = vadd.f32 %v509, %v513
    %v550 = vadd.f32 %v549, %v517
    %v551 = vadd.f32 %v550, %v521
    %v552 = vrot.slane %v551, 4
    %v553 = vadd.f32 %v551, %v552
    %v554 = vrot.slane %v553, 2
    %v555 = vadd.f32 %v553, %v554
    %v556 = vrot.slane %v555, 1
    %v557 = vadd.f32 %v555, %v556
    %v558 = vmax.f32 %v478, 1e-12
    %v559 = vmax.f32 %v487, 1e-12
    %v560 = vmax.f32 %v496, 1e-12
    %v561 = vmax.f32 %v505, 1e-12
    %v562 = vmax.f32 %v530, 1e-12
    %v563 = vmax.f32 %v539, 1e-12
    %v564 = vmax.f32 %v548, 1e-12
    %v565 = vmax.f32 %v557, 1e-12
    %v566 = vmul.f32 %v558, %v562
    %v567 = vmul.f32 %v559, %v563
    %v568 = vmul.f32 %v560, %v564
    %v569 = vmul.f32 %v561, %v565
    %v570 = vrsqrt.pop %v566
    %v571 = vrsqrt.pop %v567
    %v572 = vrsqrt.pop %v568
    %v573 = vrsqrt.pop %v569
    %v574 = vmul.f32 %v426, %v570
    %v575 = vmul.f32 %v435, %v571
    %v576 = vmul.f32 %v444, %v572
    %v577 = vmul.f32 %v453, %v573
    %v578 = vsub.f32 2.0, %v574
    %v579 = vsub.f32 2.0, %v575
    %v580 = vsub.f32 2.0, %v576
    %v581 = vsub.f32 2.0, %v577
    %v582 = vmul.f32 %v578, %v574
    %v583 = vmul.f32 %v579, %v575
    %v584 = vmul.f32 %v580, %v576
    %v585 = vmul.f32 %v581, %v577
    %v590 = vcombine.low %v582, %v583
    %v591 = vcombine.low %v584, %v585
    %v593 = vunpack.c.l.s4 1966171168
    %v594 = vunpack.c.0.s8 %v593
    %v595 = vlaneseq
    %v596 = vshrl.u32 %v595, 7
    %v597 = vsub.s32 %v594, %v596
    %v598 = vrot.slane %v590, %v597
    %v600 = vunpack.c.l.s4 1966171168
    %v601 = vunpack.c.0.s8 %v600
    %v602 = vlaneseq
    %v603 = vshrl.u32 %v602, 7
    %v604 = vsub.s32 %v601, %v603
    %v605 = vrot.slane %v591, %v604
    %v606 = vcombine.low %v598, %v605
    %v608 = vunpack.c.l.s4 1966171168
    %v609 = vunpack.c.0.s8 %v608
    %v610 = vlaneseq
    %v611 = vshrl.u32 %v610, 7
    %v612 = vsub.s32 %v609, %v611
    %v613 = vrot.slane %v606, %v612
    %v615 = vlaneseq
    %vm616 = vcmp.ge.s32.totalorder %v615, 0
    %vm617 = vcmp.lt.s32.totalorder %v615, 512
    %vm618 = vmand %vm616, %vm617
    %619 = vst.msk [vmem:[%s4] ss:$2 sm:$0xf] %vm618, %v613
    %v620 = vld [vmem:[#allocation9] sm:$0xff]
    %v621 = vld [vmem:[#allocation9 + $0x8] sm:$0xff]
    %v622 = vld [vmem:[#allocation9 + $0x10] sm:$0xff]
    %v623 = vld [vmem:[#allocation9 + $0x18] sm:$0xff]
    %v624 = vld [vmem:[#allocation9 + $0x20] sm:$0xff]
    %v625 = vld [vmem:[#allocation9 + $0x28] sm:$0xff]
    %v626 = vld [vmem:[#allocation9 + $0x30] sm:$0xff]
    %v627 = vld [vmem:[#allocation9 + $0x38] sm:$0xff]
    %v628 = vld [vmem:[#allocation9 + $0x40] sm:$0xff]
    %v629 = vld [vmem:[#allocation9 + $0x48] sm:$0xff]
    %v630 = vld [vmem:[#allocation9 + $0x50] sm:$0xff]
    %v631 = vld [vmem:[#allocation9 + $0x58] sm:$0xff]
    %v632 = vld [vmem:[#allocation9 + $0x60] sm:$0xff]
    %v633 = vld [vmem:[#allocation9 + $0x68] sm:$0xff]
    %v634 = vld [vmem:[#allocation9 + $0x70] sm:$0xff]
    %v635 = vld [vmem:[#allocation9 + $0x78] sm:$0xff]
    %v636 = vld [vmem:[#allocation10] sm:$0xff]
    %v637 = vld [vmem:[#allocation10 + $0x8] sm:$0xff]
    %v638 = vld [vmem:[#allocation10 + $0x10] sm:$0xff]
    %v639 = vld [vmem:[#allocation10 + $0x18] sm:$0xff]
    %v640 = vld [vmem:[#allocation10 + $0x20] sm:$0xff]
    %v641 = vld [vmem:[#allocation10 + $0x28] sm:$0xff]
    %v642 = vld [vmem:[#allocation10 + $0x30] sm:$0xff]
    %v643 = vld [vmem:[#allocation10 + $0x38] sm:$0xff]
    %v644 = vld [vmem:[#allocation10 + $0x40] sm:$0xff]
    %v645 = vld [vmem:[#allocation10 + $0x48] sm:$0xff]
    %v646 = vld [vmem:[#allocation10 + $0x50] sm:$0xff]
    %v647 = vld [vmem:[#allocation10 + $0x58] sm:$0xff]
    %v648 = vld [vmem:[#allocation10 + $0x60] sm:$0xff]
    %v649 = vld [vmem:[#allocation10 + $0x68] sm:$0xff]
    %v650 = vld [vmem:[#allocation10 + $0x70] sm:$0xff]
    %v651 = vld [vmem:[#allocation10 + $0x78] sm:$0xff]
    %v652 = vmul.f32 %v620, %v636
    %v653 = vmul.f32 %v621, %v637
    %v654 = vmul.f32 %v622, %v638
    %v655 = vmul.f32 %v623, %v639
    %v656 = vmul.f32 %v624, %v640
    %v657 = vmul.f32 %v625, %v641
    %v658 = vmul.f32 %v626, %v642
    %v659 = vmul.f32 %v627, %v643
    %v660 = vmul.f32 %v628, %v644
    %v661 = vmul.f32 %v629, %v645
    %v662 = vmul.f32 %v630, %v646
    %v663 = vmul.f32 %v631, %v647
    %v664 = vmul.f32 %v632, %v648
    %v665 = vmul.f32 %v633, %v649
    %v666 = vmul.f32 %v634, %v650
    %v667 = vmul.f32 %v635, %v651
    %v668 = vadd.f32 %v652, %v656
    %v669 = vadd.f32 %v668, %v660
    %v670 = vadd.f32 %v669, %v664
    %v671 = vrot.slane %v670, 4
    %v672 = vadd.f32 %v670, %v671
    %v673 = vrot.slane %v672, 2
    %v674 = vadd.f32 %v672, %v673
    %v675 = vrot.slane %v674, 1
    %v676 = vadd.f32 %v674, %v675
    %v677 = vadd.f32 %v653, %v657
    %v678 = vadd.f32 %v677, %v661
    %v679 = vadd.f32 %v678, %v665
    %v680 = vrot.slane %v679, 4
    %v681 = vadd.f32 %v679, %v680
    %v682 = vrot.slane %v681, 2
    %v683 = vadd.f32 %v681, %v682
    %v684 = vrot.slane %v683, 1
    %v685 = vadd.f32 %v683, %v684
    %v686 = vadd.f32 %v654, %v658
    %v687 = vadd.f32 %v686, %v662
    %v688 = vadd.f32 %v687, %v666
    %v689 = vrot.slane %v688, 4
    %v690 = vadd.f32 %v688, %v689
    %v691 = vrot.slane %v690, 2
    %v692 = vadd.f32 %v690, %v691
    %v693 = vrot.slane %v692, 1
    %v694 = vadd.f32 %v692, %v693
    %v695 = vadd.f32 %v655, %v659
    %v696 = vadd.f32 %v695, %v663
    %v697 = vadd.f32 %v696, %v667
    %v698 = vrot.slane %v697, 4
    %v699 = vadd.f32 %v697, %v698
    %v700 = vrot.slane %v699, 2
    %v701 = vadd.f32 %v699, %v700
    %v702 = vrot.slane %v701, 1
    %v703 = vadd.f32 %v701, %v702
    %v704 = vmul.f32 %v620, %v620
    %v705 = vmul.f32 %v621, %v621
    %v706 = vmul.f32 %v622, %v622
    %v707 = vmul.f32 %v623, %v623
    %v708 = vmul.f32 %v624, %v624
    %v709 = vmul.f32 %v625, %v625
    %v710 = vmul.f32 %v626, %v626
    %v711 = vmul.f32 %v627, %v627
    %v712 = vmul.f32 %v628, %v628
    %v713 = vmul.f32 %v629, %v629
    %v714 = vmul.f32 %v630, %v630
    %v715 = vmul.f32 %v631, %v631
    %v716 = vmul.f32 %v632, %v632
    %v717 = vmul.f32 %v633, %v633
    %v718 = vmul.f32 %v634, %v634
    %v719 = vmul.f32 %v635, %v635
    %v720 = vadd.f32 %v704, %v708
    %v721 = vadd.f32 %v720, %v712
    %v722 = vadd.f32 %v721, %v716
    %v723 = vrot.slane %v722, 4
    %v724 = vadd.f32 %v722, %v723
    %v725 = vrot.slane %v724, 2
    %v726 = vadd.f32 %v724, %v725
    %v727 = vrot.slane %v726, 1
    %v728 = vadd.f32 %v726, %v727
    %v729 = vadd.f32 %v705, %v709
    %v730 = vadd.f32 %v729, %v713
    %v731 = vadd.f32 %v730, %v717
    %v732 = vrot.slane %v731, 4
    %v733 = vadd.f32 %v731, %v732
    %v734 = vrot.slane %v733, 2
    %v735 = vadd.f32 %v733, %v734
    %v736 = vrot.slane %v735, 1
    %v737 = vadd.f32 %v735, %v736
    %v738 = vadd.f32 %v706, %v710
    %v739 = vadd.f32 %v738, %v714
    %v740 = vadd.f32 %v739, %v718
    %v741 = vrot.slane %v740, 4
    %v742 = vadd.f32 %v740, %v741
    %v743 = vrot.slane %v742, 2
    %v744 = vadd.f32 %v742, %v743
    %v745 = vrot.slane %v744, 1
    %v746 = vadd.f32 %v744, %v745
    %v747 = vadd.f32 %v707, %v711
    %v748 = vadd.f32 %v747, %v715
    %v749 = vadd.f32 %v748, %v719
    %v750 = vrot.slane %v749, 4
    %v751 = vadd.f32 %v749, %v750
    %v752 = vrot.slane %v751, 2
    %v753 = vadd.f32 %v751, %v752
    %v754 = vrot.slane %v753, 1
    %v755 = vadd.f32 %v753, %v754
    %v756 = vmul.f32 %v636, %v636
    %v757 = vmul.f32 %v637, %v637
    %v758 = vmul.f32 %v638, %v638
    %v759 = vmul.f32 %v639, %v639
    %v760 = vmul.f32 %v640, %v640
    %v761 = vmul.f32 %v641, %v641
    %v762 = vmul.f32 %v642, %v642
    %v763 = vmul.f32 %v643, %v643
    %v764 = vmul.f32 %v644, %v644
    %v765 = vmul.f32 %v645, %v645
    %v766 = vmul.f32 %v646, %v646
    %v767 = vmul.f32 %v647, %v647
    %v768 = vmul.f32 %v648, %v648
    %v769 = vmul.f32 %v649, %v649
    %v770 = vmul.f32 %v650, %v650
    %v771 = vmul.f32 %v651, %v651
    %v772 = vadd.f32 %v756, %v760
    %v773 = vadd.f32 %v772, %v764
    %v774 = vadd.f32 %v773, %v768
    %v775 = vrot.slane %v774, 4
    %v776 = vadd.f32 %v774, %v775
    %v777 = vrot.slane %v776, 2
    %v778 = vadd.f32 %v776, %v777
    %v779 = vrot.slane %v778, 1
    %v780 = vadd.f32 %v778, %v779
    %v781 = vadd.f32 %v757, %v761
    %v782 = vadd.f32 %v781, %v765
    %v783 = vadd.f32 %v782, %v769
    %v784 = vrot.slane %v783, 4
    %v785 = vadd.f32 %v783, %v784
    %v786 = vrot.slane %v785, 2
    %v787 = vadd.f32 %v785, %v786
    %v788 = vrot.slane %v787, 1
    %v789 = vadd.f32 %v787, %v788
    %v790 = vadd.f32 %v758, %v762
    %v791 = vadd.f32 %v790, %v766
    %v792 = vadd.f32 %v791, %v770
    %v793 = vrot.slane %v792, 4
    %v794 = vadd.f32 %v792, %v793
    %v795 = vrot.slane %v794, 2
    %v796 = vadd.f32 %v794, %v795
    %v797 = vrot.slane %v796, 1
    %v798 = vadd.f32 %v796, %v797
    %v799 = vadd.f32 %v759, %v763
    %v800 = vadd.f32 %v799, %v767
    %v801 = vadd.f32 %v800, %v771
    %v802 = vrot.slane %v801, 4
    %v803 = vadd.f32 %v801, %v802
    %v804 = vrot.slane %v803, 2
    %v805 = vadd.f32 %v803, %v804
    %v806 = vrot.slane %v805, 1
    %v807 = vadd.f32 %v805, %v806
    %v808 = vmax.f32 %v728, 1e-12
    %v809 = vmax.f32 %v737, 1e-12
    %v810 = vmax.f32 %v746, 1e-12
    %v811 = vmax.f32 %v755, 1e-12
    %v812 = vmax.f32 %v780, 1e-12
    %v813 = vmax.f32 %v789, 1e-12
    %v814 = vmax.f32 %v798, 1e-12
    %v815 = vmax.f32 %v807, 1e-12
    %v816 = vmul.f32 %v808, %v812
    %v817 = vmul.f32 %v809, %v813
    %v818 = vmul.f32 %v810, %v814
    %v819 = vmul.f32 %v811, %v815
    %v820 = vrsqrt.pop %v816
    %v821 = vrsqrt.pop %v817
    %v822 = vrsqrt.pop %v818
    %v823 = vrsqrt.pop %v819
    %v824 = vmul.f32 %v676, %v820
    %v825 = vmul.f32 %v685, %v821
    %v826 = vmul.f32 %v694, %v822
    %v827 = vmul.f32 %v703, %v823
    %v828 = vsub.f32 2.0, %v824
    %v829 = vsub.f32 2.0, %v825
    %v830 = vsub.f32 2.0, %v826
    %v831 = vsub.f32 2.0, %v827
    %v832 = vmul.f32 %v828, %v824
    %v833 = vmul.f32 %v829, %v825
    %v834 = vmul.f32 %v830, %v826
    %v835 = vmul.f32 %v831, %v827
    %v840 = vcombine.low %v832, %v833
    %v841 = vcombine.low %v834, %v835
    %v843 = vunpack.c.l.s4 1966171168
    %v844 = vunpack.c.0.s8 %v843
    %v845 = vlaneseq
    %v846 = vshrl.u32 %v845, 7
    %v847 = vsub.s32 %v844, %v846
    %v848 = vrot.slane %v840, %v847
    %v850 = vunpack.c.l.s4 1966171168
    %v851 = vunpack.c.0.s8 %v850
    %v852 = vlaneseq
    %v853 = vshrl.u32 %v852, 7
    %v854 = vsub.s32 %v851, %v853
    %v855 = vrot.slane %v841, %v854
    %v856 = vcombine.low %v848, %v855
    %v858 = vunpack.c.l.s4 1966171168
    %v859 = vunpack.c.0.s8 %v858
    %v860 = vlaneseq
    %v861 = vshrl.u32 %v860, 7
    %v862 = vsub.s32 %v859, %v861
    %v863 = vrot.slane %v856, %v862
    %s865 = scalar_lea.vmem %s4, 1
    %866 = vst.msk [vmem:[%s865] ss:$2 sm:$0xf] %vm618, %v863
    // Predicated region
    $region30: #{focal_cos_loss.2} parent=1 // pred_check
      _
    $region31: #{focal_cos_loss.2} parent=1 // pred_check_branch
      %868 = sbr.rel (0) target = $region33
    $region32: #{focal_cos_loss.2} parent=1 // pred_region
      _
    $region33: #{focal_cos_loss.2} parent=1 // pred_fallthru
      _
    // Predicated region
    $region34: #{focal_cos_loss.2} parent=1 // pred_check
      _
    $region35: #{focal_cos_loss.2} parent=1 // pred_check_branch
      %870 = sbr.rel (0) target = $region37
    $region36: #{focal_cos_loss.2} parent=1 // pred_region
      _
    $region37: #{focal_cos_loss.2} parent=1 // pred_fallthru
      _
    %871 = vsyncpa [#allocation3], 1
    %872 = vsyncpa [#allocation5], 1

</llo_original>
